<compile_context>
chip_gen: v5e
topology: v5e:2x2
jax: 0.10.0
libtpu: 0.0.40
codegen_flags: <defaults>
</compile_context>

<pallas_src>
import functools

import numpy as np
import jax
import jax.numpy as jnp
from jax.experimental import pallas as pl
from jax.experimental.pallas import tpu as pltpu

_LANES = 128
_EPS = 1e-15


def npmle_nll_kernel(m_z_ref, delta_ref, logj_ref, out_ref, *, n, j):
    # m_z_ref, delta_ref : [R, 128] f32 (zero-padded past n)
    # logj_ref           : [1, Jp]  f32 (zero-padded past j)
    # out_ref            : [1, 1]   f32 in SMEM
    R, C = m_z_ref.shape
    Jp = logj_ref.shape[1]

    m_z = m_z_ref[...]
    delta = delta_ref[...]
    logj = logj_ref[...]

    # Validity masks for the padded tails (int32 iota compares).
    flat_idx = (jax.lax.broadcasted_iota(jnp.int32, (R, C), 0) * C
                + jax.lax.broadcasted_iota(jnp.int32, (R, C), 1))
    valid = (flat_idx < n).astype(jnp.float32)                       # [R, C]
    jvalid = (jax.lax.broadcasted_iota(jnp.int32, (1, Jp), 1) < j
              ).astype(jnp.float32)                                  # [1, Jp]

    jumps = jnp.exp(logj) * jvalid                                   # [1, Jp]

    # Within-row inclusive cumsum of delta over the 128 lanes via a single
    # [R,128] @ [128,128] triangular matmul (replaces the old N x N mask).
    lo = jax.lax.broadcasted_iota(jnp.int32, (C, C), 0)
    hi = jax.lax.broadcasted_iota(jnp.int32, (C, C), 1)
    tri = (lo <= hi).astype(jnp.float32)                             # [C, C]
    csum_row = jnp.dot(delta, tri, preferred_element_type=jnp.float32)  # [R, C]

    # Step-mask sublane iota, shared across all rows.
    jsub = jax.lax.broadcasted_iota(jnp.int32, (Jp, C), 0)           # [Jp, C]

    em = jnp.exp(m_z)            # packed [R, C] EUP pass
    dval = delta * valid         # [R, C]

    surv_s = jnp.zeros((), jnp.float32)
    dlam_s = jnp.zeros((), jnp.float32)
    dlogh_s = jnp.zeros((), jnp.float32)
    carry = jnp.zeros((), jnp.float32)   # events seen in earlier rows

    for r in range(R):           # R = ceil(N / 128): small static trip count
        cd_r = (csum_row[r:r + 1, :] + carry).astype(jnp.int32)      # [1, C]

        # Fused scatter + cumsum: h[i] = sum_j jumps[j] * 1{j < cum_delta[i]}
        step = (jsub < cd_r).astype(jnp.float32)                     # [Jp, C]
        h_r = jnp.dot(jumps, step, preferred_element_type=jnp.float32)  # [1, C]

        log_h_r = jnp.log(h_r + _EPS)
        lam_r = log_h_r + m_z[r:r + 1, :]
        v_r = valid[r:r + 1, :]
        d_r = dval[r:r + 1, :]

        # Extreme-value eps: cumulative_hazard(lam) = exp(lam) = (h+eps)*exp(m_z)
        surv_s = surv_s + jnp.sum(v_r * (h_r + _EPS) * em[r:r + 1, :])
        dlam_s = dlam_s + jnp.sum(d_r * lam_r)          # log_hazard(lam) = lam
        dlogh_s = dlogh_s + jnp.sum(d_r * log_h_r)

        carry = carry + jnp.sum(delta[r:r + 1, :])

    intensity = -dlam_s - jnp.sum(logj * jvalid) + dlogh_s
    out_ref[0, 0] = (surv_s + intensity) / np.float32(n)


def npmle_nll(m_z, y, delta, log_jump_sizes):
    """m_z, y, delta: [N, 1]; log_jump_sizes: [J].  Returns NLL of shape [1]."""
    del y  # y only affects the cached anchor, not the forward loss value
    n = int(m_z.shape[0])
    j = int(log_jump_sizes.shape[0])
    C = _LANES
    R = (n + C - 1) // C
    n_pad = R * C
    j_pad = ((j + C - 1) // C) * C

    m_z_p = jnp.pad(m_z.reshape(-1).astype(jnp.float32), (0, n_pad - n)).reshape(R, C)
    delta_p = jnp.pad(delta.reshape(-1).astype(jnp.float32), (0, n_pad - n)).reshape(R, C)
    logj_p = jnp.pad(log_jump_sizes.reshape(-1).astype(jnp.float32),
                     (0, j_pad - j)).reshape(1, j_pad)

    cost = pl.CostEstimate(
        flops=2 * n_pad * (j_pad + C) + 12 * n_pad,
        transcendentals=2 * n_pad + j_pad,
        bytes_accessed=4 * (2 * n_pad + j_pad + 1),
    )

    out = pl.pallas_call(
        functools.partial(npmle_nll_kernel, n=n, j=j),
        out_shape=jax.ShapeDtypeStruct((1, 1), jnp.float32),
        in_specs=[
            pl.BlockSpec(memory_space=pltpu.MemorySpace.VMEM),
            pl.BlockSpec(memory_space=pltpu.MemorySpace.VMEM),
            pl.BlockSpec(memory_space=pltpu.MemorySpace.VMEM),
        ],
        out_specs=pl.BlockSpec(memory_space=pltpu.MemorySpace.SMEM),
        cost_estimate=cost,
    )(m_z_p, delta_p, logj_p)
    return out.reshape(1)


def _reference_numpy(m_z, delta, log_jump_sizes):
    """Pure numpy transcription of NPMLENLL.forward with extreme-value eps."""
    mz = np.asarray(m_z, dtype=np.float64).reshape(-1)
    d = np.asarray(delta, dtype=np.float64).reshape(-1)
    lj = np.asarray(log_jump_sizes, dtype=np.float64)
    N = mz.shape[0]
    total = np.zeros(N, dtype=np.float64)
    unc = np.where(d > 0)[0]
    total[unc] = np.exp(lj)
    log_h = np.log(np.cumsum(total) + 1e-15)
    lam = log_h + mz
    surv_part = np.exp(lam).sum()
    intensity_part = -(lam[unc]).sum() - lj.sum() + log_h[unc].sum()
    return (surv_part + intensity_part) / N


if __name__ == "__main__":
    key = jax.random.PRNGKey(0)
    k1, k2, k3, k4 = jax.random.split(key, 4)

    # --- Test 1: tiny N (single packed row, heavy lane padding) ---
    N = 8
    delta = jnp.array([1., 0., 1., 1., 0., 1., 0., 1.], dtype=jnp.float32).reshape(N, 1)
    num_jumps = int(np.asarray(delta).sum())  # module assumes J == #uncensored
    m_z = jax.random.normal(k1, (N, 1), dtype=jnp.float32)
    y = jnp.sort(jax.random.uniform(k2, (N, 1), dtype=jnp.float32), axis=0)
    log_jump_sizes = jnp.log(0.001 * jnp.ones((num_jumps,), dtype=jnp.float32))

    out = npmle_nll(m_z, y, delta, log_jump_sizes)
    jax.block_until_ready(out)
    ref = _reference_numpy(m_z, delta, log_jump_sizes)
    assert np.allclose(np.asarray(out)[0], ref, rtol=1e-4, atol=1e-4), (out, ref)

    # --- Test 2: multi-row path (R > 1): cross-row carry + padding masks ---
    N2 = 300
    delta2 = (jax.random.uniform(k3, (N2, 1)) < 0.6).astype(jnp.float32)
    delta2 = delta2.at[0, 0].set(1.0)
    num_jumps2 = int(np.asarray(delta2).sum())
    m_z2 = 0.5 * jax.random.normal(k4, (N2, 1), dtype=jnp.float32)
    y2 = jnp.sort(jax.random.uniform(k2, (N2, 1), dtype=jnp.float32), axis=0)
    log_jump_sizes2 = jnp.log(0.001 * jnp.ones((num_jumps2,), dtype=jnp.float32))

    out2 = npmle_nll(m_z2, y2, delta2, log_jump_sizes2)
    jax.block_until_ready(out2)
    ref2 = _reference_numpy(m_z2, delta2, log_jump_sizes2)
    assert np.allclose(np.asarray(out2)[0], ref2, rtol=1e-4, atol=1e-4), (out2, ref2)

    # TODO(synk): _record_anchor / get_transform_prediction (searchsorted +
    # cached anchor state) are inference-time helpers outside forward(); not
    # kernelized.
    print("KERNEL_OK")
</pallas_src>

<mosaic_0001>
module attributes {stable_mosaic.version = 11 : i64} {
  func.func @npmle_nll_kernel(%arg0: memref<1x128xf32, #tpu.memory_space<vmem>>, %arg1: memref<1x128xf32, #tpu.memory_space<vmem>>, %arg2: memref<1x128xf32, #tpu.memory_space<vmem>>, %arg3: memref<1x1xf32, #tpu.memory_space<smem>>) attributes {dimension_semantics = [], scalar_prefetch = 0 : i64, scratch_operands = 0 : i64, tpu.core_type = #tpu.core_type<tc>} {
    %c0 = arith.constant 0 : index
    %c0_0 = arith.constant 0 : index
    %0 = vector.load %arg0[%c0, %c0_0] : memref<1x128xf32, #tpu.memory_space<vmem>>, vector<1x128xf32>
    %c0_1 = arith.constant 0 : index
    %c0_2 = arith.constant 0 : index
    %1 = vector.load %arg1[%c0_1, %c0_2] : memref<1x128xf32, #tpu.memory_space<vmem>>, vector<1x128xf32>
    %c0_3 = arith.constant 0 : index
    %c0_4 = arith.constant 0 : index
    %2 = vector.load %arg2[%c0_3, %c0_4] : memref<1x128xf32, #tpu.memory_space<vmem>>, vector<1x128xf32>
    %3 = tpu.iota {dimensions = array<i32: 0>} : vector<1x128xi32>
    %c128_i32 = arith.constant 128 : i32
    %4 = vector.broadcast %c128_i32 : i32 to vector<1x128xi32>
    %5 = arith.muli %3, %4 : vector<1x128xi32>
    %6 = tpu.iota {dimensions = array<i32: 1>} : vector<1x128xi32>
    %7 = arith.addi %5, %6 : vector<1x128xi32>
    %c8_i32 = arith.constant 8 : i32
    %8 = vector.broadcast %c8_i32 : i32 to vector<1x128xi32>
    %9 = arith.cmpi slt, %7, %8 : vector<1x128xi32>
    %10 = arith.extui %9 : vector<1x128xi1> to vector<1x128xi32>
    %11 = arith.sitofp %10 : vector<1x128xi32> to vector<1x128xf32>
    %12 = tpu.iota {dimensions = array<i32: 1>} : vector<1x128xi32>
    %c5_i32 = arith.constant 5 : i32
    %13 = vector.broadcast %c5_i32 : i32 to vector<1x128xi32>
    %14 = arith.cmpi slt, %12, %13 : vector<1x128xi32>
    %15 = arith.extui %14 : vector<1x128xi1> to vector<1x128xi32>
    %16 = arith.sitofp %15 : vector<1x128xi32> to vector<1x128xf32>
    %17 = math.exp %2 : vector<1x128xf32>
    %18 = arith.mulf %17, %16 : vector<1x128xf32>
    %19 = tpu.iota {dimensions = array<i32: 0>} : vector<128x128xi32>
    %20 = tpu.iota {dimensions = array<i32: 1>} : vector<128x128xi32>
    %21 = arith.cmpi sle, %19, %20 : vector<128x128xi32>
    %22 = arith.extui %21 : vector<128x128xi1> to vector<128x128xi32>
    %23 = arith.sitofp %22 : vector<128x128xi32> to vector<128x128xf32>
    %cst = arith.constant dense<0.000000e+00> : vector<1x128xf32>
    %24 = tpu.matmul %1, %23, %cst {dimension_numbers = #tpu.dot_dimension_numbers<[1], [0], [0], [1], [0, 0, 1, 1], [], []>} : vector<1x128xf32>, vector<128x128xf32>, vector<1x128xf32> -> vector<1x128xf32>
    %25 = tpu.iota {dimensions = array<i32: 0>} : vector<128x128xi32>
    %26 = math.exp %0 : vector<1x128xf32>
    %27 = arith.mulf %1, %11 : vector<1x128xf32>
    %cst_5 = arith.constant 0.000000e+00 : f32
    %28 = vector.broadcast %cst_5 : f32 to vector<1x128xf32>
    %29 = arith.addf %24, %28 : vector<1x128xf32>
    %30 = arith.fptosi %29 : vector<1x128xf32> to vector<1x128xi32>
    %31 = vector.broadcast %30 : vector<1x128xi32> to vector<128x128xi32>
    %32 = arith.cmpi slt, %25, %31 : vector<128x128xi32>
    %33 = arith.extui %32 : vector<128x128xi1> to vector<128x128xi32>
    %34 = arith.sitofp %33 : vector<128x128xi32> to vector<128x128xf32>
    %cst_6 = arith.constant dense<0.000000e+00> : vector<1x128xf32>
    %35 = tpu.matmul %18, %34, %cst_6 {dimension_numbers = #tpu.dot_dimension_numbers<[1], [0], [0], [1], [0, 0, 1, 1], [], []>} : vector<1x128xf32>, vector<128x128xf32>, vector<1x128xf32> -> vector<1x128xf32>
    %cst_7 = arith.constant 1.000000e-15 : f32
    %36 = vector.broadcast %cst_7 : f32 to vector<1x128xf32>
    %37 = arith.addf %35, %36 : vector<1x128xf32>
    %38 = math.log %37 : vector<1x128xf32>
    %39 = arith.addf %38, %0 : vector<1x128xf32>
    %cst_8 = arith.constant 1.000000e-15 : f32
    %40 = vector.broadcast %cst_8 : f32 to vector<1x128xf32>
    %41 = arith.addf %35, %40 : vector<1x128xf32>
    %42 = arith.mulf %11, %41 : vector<1x128xf32>
    %43 = arith.mulf %42, %26 : vector<1x128xf32>
    %44 = vector.shape_cast %43 : vector<1x128xf32> to vector<1x1x128xf32>
    %cst_9 = arith.constant dense<0.000000e+00> : vector<1xf32>
    %45 = vector.multi_reduction <add>, %44, %cst_9 [1, 2] : vector<1x1x128xf32> to vector<1xf32>
    %46 = vector.shape_cast %45 : vector<1xf32> to vector<1x1x1xf32>
    %47 = vector.extract %46[0, 0, 0] : f32 from vector<1x1x1xf32>
    %cst_10 = arith.constant 0.000000e+00 : f32
    %48 = arith.addf %cst_10, %47 : f32
    %49 = arith.mulf %27, %39 : vector<1x128xf32>
    %50 = vector.shape_cast %49 : vector<1x128xf32> to vector<1x1x128xf32>
    %cst_11 = arith.constant dense<0.000000e+00> : vector<1xf32>
    %51 = vector.multi_reduction <add>, %50, %cst_11 [1, 2] : vector<1x1x128xf32> to vector<1xf32>
    %52 = vector.shape_cast %51 : vector<1xf32> to vector<1x1x1xf32>
    %53 = vector.extract %52[0, 0, 0] : f32 from vector<1x1x1xf32>
    %cst_12 = arith.constant 0.000000e+00 : f32
    %54 = arith.addf %cst_12, %53 : f32
    %55 = arith.mulf %27, %38 : vector<1x128xf32>
    %56 = vector.shape_cast %55 : vector<1x128xf32> to vector<1x1x128xf32>
    %cst_13 = arith.constant dense<0.000000e+00> : vector<1xf32>
    %57 = vector.multi_reduction <add>, %56, %cst_13 [1, 2] : vector<1x1x128xf32> to vector<1xf32>
    %58 = vector.shape_cast %57 : vector<1xf32> to vector<1x1x1xf32>
    %59 = vector.extract %58[0, 0, 0] : f32 from vector<1x1x1xf32>
    %cst_14 = arith.constant 0.000000e+00 : f32
    %60 = arith.addf %cst_14, %59 : f32
    %cst_15 = arith.constant 0.000000e+00 : f32
    %61 = arith.subf %cst_15, %54 : f32
    %62 = arith.mulf %2, %16 : vector<1x128xf32>
    %63 = vector.shape_cast %62 : vector<1x128xf32> to vector<1x1x128xf32>
    %cst_16 = arith.constant dense<0.000000e+00> : vector<1xf32>
    %64 = vector.multi_reduction <add>, %63, %cst_16 [1, 2] : vector<1x1x128xf32> to vector<1xf32>
    %65 = vector.shape_cast %64 : vector<1xf32> to vector<1x1x1xf32>
    %66 = vector.extract %65[0, 0, 0] : f32 from vector<1x1x1xf32>
    %67 = arith.subf %61, %66 : f32
    %68 = arith.addf %67, %60 : f32
    %69 = arith.addf %48, %68 : f32
    %cst_17 = arith.constant 8.000000e+00 : f32
    %70 = arith.divf %69, %cst_17 : f32
    %c0_18 = arith.constant 0 : index
    %c0_19 = arith.constant 0 : index
    %71 = memref.load %arg3[%c0_18, %c0_19] : memref<1x1xf32, #tpu.memory_space<smem>>
    memref.store %70, %arg3[%c0_18, %c0_19] : memref<1x1xf32, #tpu.memory_space<smem>>
    return
  }
}

</mosaic_0001>

<llo_original>
// kernel: tpu_custom_call.1
$region0: #{tpu_custom_call.1}
  #allocation0 [shape = 'u32[]', space=smem, size = 0x4, offset = 0x4, fixed_abs, tag = 'smem constant byte address 0x4 - core index']
  #allocation1 [shape = 'u32[72,128]{1,0:T(1,128)}', space=vmem, size = 0x9000, scoped, tag = 'internal scratch']
  %s0 = inlined_call_operand.hbm [shape: f32[1,128], index: 0, kind: input, shape index: {}]
  %s1 = inlined_call_operand.hbm [shape: f32[1,128], index: 1, kind: input, shape index: {}]
  %s2 = inlined_call_operand.vmem [shape: f32[1,128], index: 2, kind: input, shape index: {}]
  %s3 = inlined_call_operand.hbm [shape: f32[1,1], index: 3, kind: output, shape index: {}]
  %s4 = sld [smem:[#allocation0]]
  $region30: #{tpu_custom_call.1} parent=0
    _
  %s6 = ssub.s32 1, %s4
  %s7 = scalar_select 0, %s6, %s4
  $region1: #{tpu_custom_call.1} parent=0
    #allocation2 [shape = 'u8[512]{0}', space=vmem, size = 0x400, scoped, tag = 'input window, operand 0, single buffered']
    #allocation3 [shape = 's32[1]{0}', space=sflag, size = 0x4, scoped, tag = 'scoped memory for tpu_custom_call.1']
    #allocation4 [shape = 's32[1]{0}', space=sflag, size = 0x4, scoped, tag = 'scoped memory for tpu_custom_call.1']
    #allocation5 [shape = 'u8[512]{0}', space=vmem, size = 0x400, scoped, tag = 'input window, operand 1, single buffered']
    #allocation6 [shape = 's32[1]{0}', space=sflag, size = 0x4, scoped, tag = 'scoped memory for tpu_custom_call.1']
    #allocation7 [shape = 'u8[512]{0}', space=smem, size = 0x200, scoped, tag = 'output window, operand 0, single buffered']
    %8 = vsyncpa [#allocation3], 0
    %9 = vsyncpa [#allocation6], 0
    %10 = vsyncpa [#allocation4], 0
    // Predicated region
    $region2: #{tpu_custom_call.1} parent=1 // pred_check
      _
    $region3: #{tpu_custom_call.1} parent=1 // pred_check_branch
      %12 = sbr.rel (0) target = $region5
    $region4: #{tpu_custom_call.1} parent=1 // pred_region
      %14 = vsyncadd [#allocation3], 0
      %s16 = sshll.u32 %s0, 4
      %s17 = int_to_ptr.hbm [resolvable:$true] %s16
      %s18 = sshll.u32 [#allocation2], 4
      %s19 = int_to_ptr.vmem [resolvable:$true] %s18
      %21 = dma.hbm_to_vmem [thread:$0]  %s17, 16, %s19, [#allocation3]
    $region5: #{tpu_custom_call.1} parent=1 // pred_fallthru
      _
    // Predicated region
    $region6: #{tpu_custom_call.1} parent=1 // pred_check
      _
    $region7: #{tpu_custom_call.1} parent=1 // pred_check_branch
      %23 = sbr.rel (0) target = $region9
    $region8: #{tpu_custom_call.1} parent=1 // pred_region
      %25 = vsyncadd [#allocation6], 0
      %s27 = sshll.u32 %s1, 4
      %s28 = int_to_ptr.hbm [resolvable:$true] %s27
      %s29 = sshll.u32 [#allocation5], 4
      %s30 = int_to_ptr.vmem [resolvable:$true] %s29
      %32 = dma.hbm_to_vmem [thread:$0]  %s28, 16, %s30, [#allocation6]
    $region9: #{tpu_custom_call.1} parent=1 // pred_fallthru
      _
    // Predicated region
    $region10: #{tpu_custom_call.1} parent=1 // pred_check
      _
    $region11: #{tpu_custom_call.1} parent=1 // pred_check_branch
      %34 = sbr.rel (0) target = $region13
    $region12: #{tpu_custom_call.1} parent=1 // pred_region
      _
    $region13: #{tpu_custom_call.1} parent=1 // pred_fallthru
      _
    // Predicated region
    $region14: #{tpu_custom_call.1} parent=1 // pred_check
      _
    $region15: #{tpu_custom_call.1} parent=1 // pred_check_branch
      %36 = sbr.rel (0) target = $region17
    $region16: #{tpu_custom_call.1} parent=1 // pred_region
      %38 = dma.done [#allocation3], 16
    $region17: #{tpu_custom_call.1} parent=1 // pred_fallthru
      _
    // Predicated region
    $region18: #{tpu_custom_call.1} parent=1 // pred_check
      _
    $region19: #{tpu_custom_call.1} parent=1 // pred_check_branch
      %40 = sbr.rel (0) target = $region21
    $region20: #{tpu_custom_call.1} parent=1 // pred_region
      %42 = dma.done [#allocation6], 16
    $region21: #{tpu_custom_call.1} parent=1 // pred_fallthru
      _
    %v43 = vld [vmem:[#allocation2] sm:$0x1]
    %v44 = vld [vmem:[#allocation5] sm:$0x1]
    %v45 = vld [vmem:[%s2] sm:$0x1]
    %v46 = vlaneseq
    %v47 = vshrl.u32 %v46, 7
    %v48 = vmul.u32 %v47, 128
    %v49 = vlaneseq
    %v50 = vand.u32 %v49, 127
    %v51 = vadd.s32 %v48, %v50
    %vm52 = vcmp.lt.s32.totalorder %v51, 8
    %v53 = vsel %vm52, 1, 0
    %v54 = vcvt.s32.f32 %v53
    %vm55 = vcmp.lt.s32.totalorder %v50, 5
    %v56 = vsel %vm55, 1, 0
    %v57 = vcvt.s32.f32 %v56
    %v58 = vmul.f32 %v45, 1.442695
    %v59 = vpow.pop %v58
    %v60 = vmul.f32 %v59, %v57
    %v61 = vadd.s32 %v47, 8
    %v62 = vadd.s32 %v47, 16
    %v63 = vadd.s32 %v47, 24
    %v64 = vadd.s32 %v47, 32
    %v65 = vadd.s32 %v47, 40
    %v66 = vadd.s32 %v47, 48
    %v67 = vadd.s32 %v47, 56
    %v68 = vadd.s32 %v47, 64
    %v69 = vadd.s32 %v47, 72
    %v70 = vadd.s32 %v47, 80
    %v71 = vadd.s32 %v47, 88
    %v72 = vadd.s32 %v47, 96
    %v73 = vadd.s32 %v47, 104
    %v74 = vadd.s32 %v47, 112
    %v75 = vadd.s32 %v47, 120
    %vm76 = vcmp.le.s32.totalorder %v47, %v50
    %vm77 = vcmp.le.s32.totalorder %v61, %v50
    %vm78 = vcmp.le.s32.totalorder %v62, %v50
    %vm79 = vcmp.le.s32.totalorder %v63, %v50
    %vm80 = vcmp.le.s32.totalorder %v64, %v50
    %vm81 = vcmp.le.s32.totalorder %v65, %v50
    %vm82 = vcmp.le.s32.totalorder %v66, %v50
    %vm83 = vcmp.le.s32.totalorder %v67, %v50
    %vm84 = vcmp.le.s32.totalorder %v68, %v50
    %vm85 = vcmp.le.s32.totalorder %v69, %v50
    %vm86 = vcmp.le.s32.totalorder %v70, %v50
    %vm87 = vcmp.le.s32.totalorder %v71, %v50
    %vm88 = vcmp.le.s32.totalorder %v72, %v50
    %vm89 = vcmp.le.s32.totalorder %v73, %v50
    %vm90 = vcmp.le.s32.totalorder %v74, %v50
    %vm91 = vcmp.le.s32.totalorder %v75, %v50
    %v92 = vsel %vm76, 1, 0
    %v93 = vsel %vm77, 1, 0
    %v94 = vsel %vm78, 1, 0
    %v95 = vsel %vm79, 1, 0
    %v96 = vsel %vm80, 1, 0
    %v97 = vsel %vm81, 1, 0
    %v98 = vsel %vm82, 1, 0
    %v99 = vsel %vm83, 1, 0
    %v100 = vsel %vm84, 1, 0
    %v101 = vsel %vm85, 1, 0
    %v102 = vsel %vm86, 1, 0
    %v103 = vsel %vm87, 1, 0
    %v104 = vsel %vm88, 1, 0
    %v105 = vsel %vm89, 1, 0
    %v106 = vsel %vm90, 1, 0
    %v107 = vsel %vm91, 1, 0
    %v108 = vcvt.s32.f32 %v92
    %v109 = vcvt.s32.f32 %v93
    %v110 = vcvt.s32.f32 %v94
    %v111 = vcvt.s32.f32 %v95
    %v112 = vcvt.s32.f32 %v96
    %v113 = vcvt.s32.f32 %v97
    %v114 = vcvt.s32.f32 %v98
    %v115 = vcvt.s32.f32 %v99
    %v116 = vcvt.s32.f32 %v100
    %v117 = vcvt.s32.f32 %v101
    %v118 = vcvt.s32.f32 %v102
    %v119 = vcvt.s32.f32 %v103
    %v120 = vcvt.s32.f32 %v104
    %v121 = vcvt.s32.f32 %v105
    %v122 = vcvt.s32.f32 %v106
    %v123 = vcvt.s32.f32 %v107
    %v124 = vmul.f32 %v43, 1.442695
    %v125 = vpow.pop %v124
    %v126 = vmul.f32 %v44, %v54
    %127 = vmatpush.msra.mxu0 %v123
    %128 = vmatpush.msra.mxu0 %v122
    %129 = vmatpush.msra.mxu0 %v121
    %130 = vmatpush.msra.mxu0 %v120
    %131 = vmatpush.msra.mxu0 %v119
    %132 = vmatpush.msra.mxu0 %v118
    %133 = vmatpush.msra.mxu0 %v117
    %134 = vmatpush.msra.mxu0 %v116
    %135 = vmatpush.msra.mxu0 %v115
    %136 = vmatpush.msra.mxu0 %v114
    %137 = vmatpush.msra.mxu0 %v113
    %138 = vmatpush.msra.mxu0 %v112
    %139 = vmatpush.msra.mxu0 %v111
    %140 = vmatpush.msra.mxu0 %v110
    %141 = vmatpush.msra.mxu0 %v109
    %142 = vmatpush.msra.mxu0 %v108
    %143 = vmatmul.f32.gmra.mxu0 %v44
    %v144 = vpop.f32.mrf.mxu0
    %v145 = vadd.f32 0.0, %v144
    %146 = vdwg.mxu0
    %v147 = vcvt.f32.s32.to.zero.pseudo %v145
    %v148 = vperm.slane %v147, 0
    %vm149 = vcmp.lt.s32.totalorder %v47, %v148
    %vm150 = vcmp.lt.s32.totalorder %v61, %v148
    %vm151 = vcmp.lt.s32.totalorder %v62, %v148
    %vm152 = vcmp.lt.s32.totalorder %v63, %v148
    %vm153 = vcmp.lt.s32.totalorder %v64, %v148
    %vm154 = vcmp.lt.s32.totalorder %v65, %v148
    %vm155 = vcmp.lt.s32.totalorder %v66, %v148
    %vm156 = vcmp.lt.s32.totalorder %v67, %v148
    %vm157 = vcmp.lt.s32.totalorder %v68, %v148
    %vm158 = vcmp.lt.s32.totalorder %v69, %v148
    %vm159 = vcmp.lt.s32.totalorder %v70, %v148
    %vm160 = vcmp.lt.s32.totalorder %v71, %v148
    %vm161 = vcmp.lt.s32.totalorder %v72, %v148
    %vm162 = vcmp.lt.s32.totalorder %v73, %v148
    %vm163 = vcmp.lt.s32.totalorder %v74, %v148
    %vm164 = vcmp.lt.s32.totalorder %v75, %v148
    %v165 = vsel %vm149, 1, 0
    %v166 = vsel %vm150, 1, 0
    %v167 = vsel %vm151, 1, 0
    %v168 = vsel %vm152, 1, 0
    %v169 = vsel %vm153, 1, 0
    %v170 = vsel %vm154, 1, 0
    %v171 = vsel %vm155, 1, 0
    %v172 = vsel %vm156, 1, 0
    %v173 = vsel %vm157, 1, 0
    %v174 = vsel %vm158, 1, 0
    %v175 = vsel %vm159, 1, 0
    %v176 = vsel %vm160, 1, 0
    %v177 = vsel %vm161, 1, 0
    %v178 = vsel %vm162, 1, 0
    %v179 = vsel %vm163, 1, 0
    %v180 = vsel %vm164, 1, 0
    %v181 = vcvt.s32.f32 %v165
    %v182 = vcvt.s32.f32 %v166
    %v183 = vcvt.s32.f32 %v167
    %v184 = vcvt.s32.f32 %v168
    %v185 = vcvt.s32.f32 %v169
    %v186 = vcvt.s32.f32 %v170
    %v187 = vcvt.s32.f32 %v171
    %v188 = vcvt.s32.f32 %v172
    %v189 = vcvt.s32.f32 %v173
    %v190 = vcvt.s32.f32 %v174
    %v191 = vcvt.s32.f32 %v175
    %v192 = vcvt.s32.f32 %v176
    %v193 = vcvt.s32.f32 %v177
    %v194 = vcvt.s32.f32 %v178
    %v195 = vcvt.s32.f32 %v179
    %v196 = vcvt.s32.f32 %v180
    %197 = vmatpush.msra.mxu0 %v196
    %198 = vmatpush.msra.mxu0 %v195
    %199 = vmatpush.msra.mxu0 %v194
    %200 = vmatpush.msra.mxu0 %v193
    %201 = vmatpush.msra.mxu0 %v192
    %202 = vmatpush.msra.mxu0 %v191
    %203 = vmatpush.msra.mxu0 %v190
    %204 = vmatpush.msra.mxu0 %v189
    %205 = vmatpush.msra.mxu0 %v188
    %206 = vmatpush.msra.mxu0 %v187
    %207 = vmatpush.msra.mxu0 %v186
    %208 = vmatpush.msra.mxu0 %v185
    %209 = vmatpush.msra.mxu0 %v184
    %210 = vmatpush.msra.mxu0 %v183
    %211 = vmatpush.msra.mxu0 %v182
    %212 = vmatpush.msra.mxu0 %v181
    %213 = vmatmul.f32.gmra.mxu0 %v60
    %v214 = vpop.f32.mrf.mxu0
    %v215 = vadd.f32 1e-15, %v214
    %216 = vdwg.mxu0
    %v217 = vlog2.pop %v215
    %v218 = vmul.f32 %v217, 0.6931472
    %v219 = vadd.f32 %v218, %v43
    %v220 = vmul.f32 %v54, %v215
    %v221 = vmul.f32 %v220, %v125
    %vm222 = vcmask 1040384
    %v223 = vsel %vm222, %v221, 0.0
    %224 = vadd.xlane.f32.xlu0 %v223
    %v225 = vpop.xlane.xlu0 %224
    %v226 = vrot.slane %v225, 4
    %v227 = vadd.f32 %v225, %v226
    %v228 = vrot.slane %v227, 2
    %v229 = vadd.f32 %v227, %v228
    %v230 = vrot.slane %v229, 1
    %v231 = vadd.f32 %v229, %v230
    %s232 = vtos %v231
    %s233 = sadd.f32 %s232, 0.0
    %v234 = vmul.f32 %v126, %v219
    %v235 = vsel %vm222, %v234, 0.0
    %236 = vadd.xlane.f32.xlu0 %v235
    %v237 = vpop.xlane.xlu0 %236
    %v238 = vrot.slane %v237, 4
    %v239 = vadd.f32 %v237, %v238
    %v240 = vrot.slane %v239, 2
    %v241 = vadd.f32 %v239, %v240
    %v242 = vrot.slane %v241, 1
    %v243 = vadd.f32 %v241, %v242
    %s244 = vtos %v243
    %s245 = sadd.f32 %s244, 0.0
    %v246 = vmul.f32 %v126, %v218
    %v247 = vsel %vm222, %v246, 0.0
    %248 = vadd.xlane.f32.xlu0 %v247
    %v249 = vpop.xlane.xlu0 %248
    %v250 = vrot.slane %v249, 4
    %v251 = vadd.f32 %v249, %v250
    %v252 = vrot.slane %v251, 2
    %v253 = vadd.f32 %v251, %v252
    %v254 = vrot.slane %v253, 1
    %v255 = vadd.f32 %v253, %v254
    %s256 = vtos %v255
    %s257 = sadd.f32 %s256, 0.0
    %s258 = ssub.f32 0.0, %s245
    %v259 = vmul.f32 %v45, %v57
    %v260 = vsel %vm222, %v259, 0.0
    %261 = vadd.xlane.f32.xlu0 %v260
    %v262 = vpop.xlane.xlu0 %261
    %v263 = vrot.slane %v262, 4
    %v264 = vadd.f32 %v262, %v263
    %v265 = vrot.slane %v264, 2
    %v266 = vadd.f32 %v264, %v265
    %v267 = vrot.slane %v266, 1
    %v268 = vadd.f32 %v266, %v267
    %s269 = vtos %v268
    %s270 = ssub.f32 %s258, %s269
    %s271 = sadd.f32 %s270, %s257
    %s272 = sadd.f32 %s233, %s271
    %v273 = vrcp.pop 8.0
    %v274 = vmul.f32 8.0, %v273
    %v275 = vsub.f32 1.0, %v274
    %v276 = vmul.f32 %v273, %v275
    %v277 = vadd.f32 %v273, %v276
    %vm278 = vweird.f32 %v273
    %v279 = vsel %vm278, %v273, %v277
    %s280 = vtos %v279
    %s281 = smul.f32 %s272, %s280
    %s282 = scalar_lea.smem [#allocation7], 0
    %283 = sst [smem:[%s282]] %s281
    // Predicated region
    $region22: #{tpu_custom_call.1} parent=1 // pred_check
      _
    $region23: #{tpu_custom_call.1} parent=1 // pred_check_branch
      %285 = sbr.rel (0) target = $region25
    $region24: #{tpu_custom_call.1} parent=1 // pred_region
      %287 = vsyncadd [#allocation4], 0
      %s289 = sshll.u32 %s3, 4
      %s290 = int_to_ptr.hbm [resolvable:$true] %s289
      %292 = dma.smem_to_hbm [#allocation7], 16, %s290, [#allocation4]
    $region25: #{tpu_custom_call.1} parent=1 // pred_fallthru
      _
    // Predicated region
    $region26: #{tpu_custom_call.1} parent=1 // pred_check
      _
    $region27: #{tpu_custom_call.1} parent=1 // pred_check_branch
      %294 = sbr.rel (0) target = $region29
    $region28: #{tpu_custom_call.1} parent=1 // pred_region
      %296 = dma.done [#allocation4], 16
    $region29: #{tpu_custom_call.1} parent=1 // pred_fallthru
      _
    %297 = sfence
    %298 = vsyncpa [#allocation3], 1
    %299 = vsyncpa [#allocation6], 1
    %300 = vsyncpa [#allocation4], 1

</llo_original>
